<compile_context>
chip_gen: v7x
topology: tpu7x:2x2x1
jax: 0.10.0
libtpu: 0.0.40
codegen_flags: <defaults>
</compile_context>

<pallas_src>
import jax
import jax.numpy as jnp
from jax.experimental import pallas as pl
from jax.experimental.pallas import tpu as pltpu

INTWIDTH = 3
FRACWIDTH = 4
MAX_VAL = float(2 ** (INTWIDTH + FRACWIDTH) - 1)   # 127
MIN_VAL = float(-(2 ** (INTWIDTH + FRACWIDTH)))    # -128
SCALE = float(2 ** FRACWIDTH)                      # 16
INV_SCALE = 1.0 / SCALE

_LANES = 128
_TILE_ROWS = 4096   # 4096 x 128 f32 = 2 MiB per block (8 MiB double-buffered in+out)


def _round_kernel(x_ref, o_ref):
    # Upcast to f32 in registers (VPU math in f32 works on all generations,
    # including v5e which has no bf16 VALU); write back in the native dtype.
    x = x_ref[...].astype(jnp.float32)
    y = jnp.round(x * SCALE)                 # round-half-to-even, like torch.round
    y = jnp.clip(y, MIN_VAL, MAX_VAL)        # clamp to fixed-point range
    o_ref[...] = (y * INV_SCALE).astype(o_ref.dtype)


def round_forward(x):
    """Apply fixed-point (1, intwidth, fracwidth) rounding elementwise."""
    if x is None:
        return None

    orig_shape = x.shape
    dtype = x.dtype
    xf = x.reshape(-1)
    n = xf.shape[0]

    # Minimal padding: only up to a 128-lane multiple (usually a no-op for
    # NCHW activations). No full-tile padding — Pallas masks partial blocks.
    n_pad = pl.cdiv(n, _LANES) * _LANES
    if n_pad != n:
        xf = jnp.pad(xf, (0, n_pad - n))
    rows = n_pad // _LANES
    x2d = xf.reshape(rows, _LANES)

    # Single full-array block for small inputs (satisfies the "equal full array
    # dims" escape of the (8,128) rule); otherwise big 2 MiB blocks.
    tile_rows = rows if rows <= _TILE_ROWS else _TILE_ROWS
    grid = (pl.cdiv(rows, tile_rows),)

    itemsize = jnp.dtype(dtype).itemsize
    cost = pl.CostEstimate(
        flops=3 * n,
        transcendentals=0,
        bytes_accessed=2 * n * itemsize,     # one read + one write pass
    )

    out2d = pl.pallas_call(
        _round_kernel,
        out_shape=jax.ShapeDtypeStruct((rows, _LANES), dtype),
        grid_spec=pltpu.PrefetchScalarGridSpec(
            num_scalar_prefetch=0,
            grid=grid,
            in_specs=[pl.BlockSpec((tile_rows, _LANES), lambda i: (i, 0))],
            out_specs=pl.BlockSpec((tile_rows, _LANES), lambda i: (i, 0)),
        ),
        compiler_params=pltpu.CompilerParams(
            dimension_semantics=("parallel",)),
        cost_estimate=cost,
    )(x2d)

    out = out2d.reshape(-1)
    if n_pad != n:
        out = out[:n]
    return out.reshape(orig_shape)


def _reference(x):
    y = jnp.round(x.astype(jnp.float32) * SCALE)
    y = jnp.clip(y, MIN_VAL, MAX_VAL)
    return (y * INV_SCALE).astype(x.dtype)


if __name__ == "__main__":
    key = jax.random.PRNGKey(0)
    # NCHW input, scaled so some values exceed the clamp range (|x*16| > 128)
    x = jax.random.normal(key, (2, 4, 16, 16), dtype=jnp.float32) * 6.0

    out = round_forward(x)
    out = jax.block_until_ready(out)

    ref = _reference(x)
    assert out.shape == x.shape and out.dtype == x.dtype
    assert jnp.allclose(out, ref, atol=0.0, rtol=0.0), "mismatch vs reference"

    print("KERNEL_OK")
</pallas_src>

<mosaic_0001>
module attributes {stable_mosaic.version = 11 : i64} {
  func.func @_round_kernel(%arg0: i32, %arg1: memref<16x128xf32, #tpu.memory_space<vmem>>, %arg2: memref<16x128xf32, #tpu.memory_space<vmem>>) attributes {dimension_semantics = [#tpu.dimension_semantics<parallel>], iteration_bounds = array<i64: 1>, scalar_prefetch = 0 : i64, scratch_operands = 0 : i64, tpu.core_type = #tpu.core_type<tc>, window_params = [{transform_indices = @transform_0, window_bounds = array<i64: 16, 128>}, {transform_indices = @transform_1, window_bounds = array<i64: 16, 128>}]} {
    %c0 = arith.constant 0 : index
    %c0_0 = arith.constant 0 : index
    %0 = vector.load %arg1[%c0, %c0_0] : memref<16x128xf32, #tpu.memory_space<vmem>>, vector<16x128xf32>
    %cst = arith.constant 1.600000e+01 : f32
    %1 = vector.broadcast %cst : f32 to vector<16x128xf32>
    %2 = arith.mulf %0, %1 : vector<16x128xf32>
    %3 = math.roundeven %2 : vector<16x128xf32>
    %cst_1 = arith.constant -1.280000e+02 : f32
    %cst_2 = arith.constant 1.270000e+02 : f32
    %4 = vector.broadcast %cst_1 : f32 to vector<16x128xf32>
    %5 = arith.maximumf %4, %3 : vector<16x128xf32>
    %6 = vector.broadcast %cst_2 : f32 to vector<16x128xf32>
    %7 = arith.minimumf %6, %5 : vector<16x128xf32>
    %cst_3 = arith.constant 6.250000e-02 : f32
    %8 = vector.broadcast %cst_3 : f32 to vector<16x128xf32>
    %9 = arith.mulf %7, %8 : vector<16x128xf32>
    %c0_4 = arith.constant 0 : index
    %c0_5 = arith.constant 0 : index
    %10 = vector.load %arg2[%c0_4, %c0_5] : memref<16x128xf32, #tpu.memory_space<vmem>>, vector<16x128xf32>
    tpu.vector_store %arg2[%c0_4, %c0_5], %9 {strides = array<i32>} : memref<16x128xf32, #tpu.memory_space<vmem>>, vector<16x128xf32>,
    return
  }
  func.func @transform_0(%arg0: i32) -> (i32, i32) {
    %c0_i32 = arith.constant 0 : i32
    %c0_i32_0 = arith.constant 0 : i32
    return %arg0, %c0_i32 : i32, i32
  }
  func.func @transform_1(%arg0: i32) -> (i32, i32) {
    %c0_i32 = arith.constant 0 : i32
    %c0_i32_0 = arith.constant 0 : i32
    return %arg0, %c0_i32 : i32, i32
  }
}

</mosaic_0001>

<llo_original>
// kernel: tpu_custom_call.1
$region0: #{tpu_custom_call.1}
  #allocation0 [shape = 'u32[]', space=smem, size = 0x4, offset = 0x4, fixed_abs, tag = 'smem constant byte address 0x4 - core index']
  #allocation1 [shape = 'u32[144,128]{1,0:T(1,128)}', space=vmem, size = 0x12000, scoped, tag = 'internal scratch']
  %s0 = inlined_call_operand.hbm [shape: f32[16,128], index: 0, kind: input, shape index: {}]
  %s1 = inlined_call_operand.hbm [shape: f32[16,128], index: 1, kind: output, shape index: {}]
  %s2 = sld [smem:[#allocation0]]
  $region18: #{tpu_custom_call.1} parent=0
    _
  %s4 = ssub.s32 1, %s2
  %s5 = scalar_select 0, %s4, %s2
  $region1: #{tpu_custom_call.1} parent=0
    #allocation2 [shape = 'u8[8192]{0}', space=vmem, size = 0x2000, scoped, tag = 'input window, operand 0, single buffered']
    #allocation3 [shape = 's32[1]{0}', space=sflag, size = 0x4, scoped, tag = 'scoped memory for tpu_custom_call.1']
    #allocation4 [shape = 's32[1]{0}', space=sflag, size = 0x4, scoped, tag = 'scoped memory for tpu_custom_call.1']
    #allocation5 [shape = 'u8[8192]{0}', space=vmem, size = 0x2000, scoped, tag = 'output window, operand 0, single buffered']
    %6 = vsyncpa [#allocation3], 0
    %7 = vsyncpa [#allocation4], 0
    // Predicated region
    $region2: #{tpu_custom_call.1} parent=1 // pred_check
      _
    $region3: #{tpu_custom_call.1} parent=1 // pred_check_branch
      %9 = sbr.rel (0) target = $region5
    $region4: #{tpu_custom_call.1} parent=1 // pred_region
      %s11 = ssub.s32 256, 256
      %12 = vsyncadd [#allocation3], %s11
      %s13 = sshll.u32 [#allocation2], 4
      %s14 = int_to_ptr.vmem [resolvable:$true] %s13
      %19 = dma.hbm_to_vmem [thread:$0]  %s0, 256, %s14, [#allocation3], 128, 128, 8
    $region5: #{tpu_custom_call.1} parent=1 // pred_fallthru
      _
    // Predicated region
    $region6: #{tpu_custom_call.1} parent=1 // pred_check
      _
    $region7: #{tpu_custom_call.1} parent=1 // pred_check_branch
      %21 = sbr.rel (0) target = $region9
    $region8: #{tpu_custom_call.1} parent=1 // pred_region
      %22 = dma.done [#allocation3], 256
    $region9: #{tpu_custom_call.1} parent=1 // pred_fallthru
      _
    %v23 = vld [vmem:[#allocation2] sm:$0xff]
    %v24 = vld [vmem:[#allocation2 + $0x8] sm:$0xff]
    %v25 = vmul.f32 %v23, 16.0
    %v26 = vmul.f32 %v24, 16.0
    %v27 = vround.ne.pseudo %v25
    %v28 = vround.ne.pseudo %v26
    %v29 = vmax.f32 %v27, -128.0
    %v30 = vmax.f32 %v28, -128.0
    %v31 = vmin.f32 %v29, 127.0
    %v32 = vmin.f32 %v30, 127.0
    %v33 = vmul.f32 %v31, 0.0625
    %v34 = vmul.f32 %v32, 0.0625
    %35 = vst [vmem:[#allocation5] sm:$0xff] %v33
    %36 = vst [vmem:[#allocation5 + $0x8] sm:$0xff] %v34
    // Predicated region
    $region10: #{tpu_custom_call.1} parent=1 // pred_check
      _
    $region11: #{tpu_custom_call.1} parent=1 // pred_check_branch
      %38 = sbr.rel (0) target = $region13
    $region12: #{tpu_custom_call.1} parent=1 // pred_region
      %s40 = ssub.s32 256, 256
      %41 = vsyncadd [#allocation4], %s40
      %s42 = sshll.u32 [#allocation5], 4
      %s43 = int_to_ptr.vmem [resolvable:$true] %s42
      %48 = dma.vmem_to_hbm [thread:$0]  %s43, 256, %s1, [#allocation4], 128, 128, 8
    $region13: #{tpu_custom_call.1} parent=1 // pred_fallthru
      _
    // Predicated region
    $region14: #{tpu_custom_call.1} parent=1 // pred_check
      _
    $region15: #{tpu_custom_call.1} parent=1 // pred_check_branch
      %50 = sbr.rel (0) target = $region17
    $region16: #{tpu_custom_call.1} parent=1 // pred_region
      %51 = dma.done [#allocation4], 256
    $region17: #{tpu_custom_call.1} parent=1 // pred_fallthru
      _
    %52 = vsyncpa [#allocation3], 1
    %53 = vsyncpa [#allocation4], 1

</llo_original>
